<compile_context>
chip_gen: v6e
topology: v6e:2x2x1
jax: 0.10.0
libtpu: 0.0.40
codegen_flags: <defaults>
</compile_context>

<pallas_src>
import math
import functools

import jax
import jax.numpy as jnp
import numpy as np
from jax.experimental import pallas as pl
from jax.experimental.pallas import tpu as pltpu


# ------------------------------ helpers --------------------------------------
def _round_up(x, m):
    return ((x + m - 1) // m) * m


def _per_l_bytes(N, Dp, HDp, Hp):
    # Approximate VMEM footprint per unit of L for one grid step.
    return N * (2 * 2 * Dp        # msa tile (bf16, x2 pipeline buffers)
                + 4 * HDp         # k (f32)
                + 2 * HDp         # e (bf16)
                + 4 * 4 * Hp      # score-sized f32 temporaries
                + 2 * 4 * Hp)     # out tile (f32, x2 pipeline buffers)


def _choose_tile_l(L, N, Dp, HDp, Hp, budget=36 * 1024 * 1024):
    """Largest lane-dense (multiple-of-128) L tile whose footprint fits the budget."""
    if L % 128 != 0:
        return L                  # small / unaligned L: take the whole axis per step
    tl = 128
    while L % (2 * tl) == 0 and (2 * tl) * _per_l_bytes(N, Dp, HDp, Hp) <= budget:
        tl *= 2
    return tl


def _vmem_limit_bytes(N, tL, Dp, HDp, Hp):
    weights = 2 * (2 * Dp * HDp * 2 + 2 * HDp * 4 + HDp * Hp * 2)
    est = tL * _per_l_bytes(N, Dp, HDp, Hp) + weights + (2 << 20)
    # >= 32 MiB so small configs are never throttled; <= 64 MiB so v7x also fits.
    return int(min(max(est, 32 * 1024 * 1024), 64 * 1024 * 1024))


# ----------------------------- Pallas kernel ----------------------------------
def _seq_weight_kernel(msa_ref, wq_ref, bq_ref, wk_ref, bk_ref, sel_ref,
                       out_ref, *, scale):
    msa_b = msa_ref[0]                                     # (N, tL, Dp) bf16
    N, tL, Dp = msa_b.shape
    HDp = wk_ref.shape[1]
    Hp = sel_ref.shape[1]

    # Key projection for ALL N sequences of this L-tile in one MXU matmul (f32 accum).
    k = jnp.dot(msa_b.reshape(N * tL, Dp), wk_ref[...],
                preferred_element_type=jnp.float32) + bk_ref[...]          # (N*tL, HDp)

    # Query projection from the target sequence (row n == 0), scaled after the bias
    # to match the PyTorch module.
    q = (jnp.dot(msa_b[0], wq_ref[...],
                 preferred_element_type=jnp.float32) + bq_ref[...]) * scale  # (tL, HDp)

    # e[n, l, c] = k[n, l, c] * q[l, c]; bf16 since it only feeds the MXU head-sum.
    e = (k.reshape(N, tL, HDp) * q[None, :, :]).astype(jnp.bfloat16)

    # Per-head reduction over d_hidden via a block-diagonal selector matmul (zero rows
    # in the padded region).
    s = jnp.dot(e.reshape(N * tL, HDp), sel_ref[...],
                preferred_element_type=jnp.float32)                        # (N*tL, Hp)

    # Lane-dense layout for the softmax + store: (N, tL, Hp) -> (N, Hp, tL), L on lanes.
    s = jnp.transpose(s.reshape(N, tL, Hp), (0, 2, 1))

    # Numerically-stable softmax over the MSA axis N (leading dim -> pure VPU reductions,
    # lane-dense exp, exact normalization).
    m = jnp.max(s, axis=0, keepdims=True)
    p = jnp.exp(s - m)
    denom = jnp.sum(p, axis=0, keepdims=True)
    attn = p / denom

    # TODO(synk): nn.Dropout(p_drop) is training-mode only; forward here matches eval().
    out_ref[0] = attn.astype(out_ref.dtype)                # (N, Hp, tL), lane-dense store


# -------------------------------- wrapper -------------------------------------
def sequence_weight_forward(msa, params, *, n_head, d_hidden):
    """Pallas implementation of SequenceWeight.forward (eval mode)."""
    B, N, L, d_msa = msa.shape
    wq, bq, wk, bk = params                    # wq/wk: (d_msa, HD); bq/bk: (HD,)
    HD = n_head * d_hidden

    Dp = _round_up(d_msa, 128)                 # lane-dense contraction dim
    HDp = _round_up(HD, 128)                   # lane-dense projection output
    Hp = _round_up(n_head, 8)                  # sublane-full head dim for scores

    # Host-side padding + bf16 casts (exact zeros; fuse into single XLA passes).
    msa_p = jnp.pad(msa, ((0, 0), (0, 0), (0, 0), (0, Dp - d_msa))).astype(jnp.bfloat16)
    wq_p = jnp.pad(wq, ((0, Dp - d_msa), (0, HDp - HD))).astype(jnp.bfloat16)
    wk_p = jnp.pad(wk, ((0, Dp - d_msa), (0, HDp - HD))).astype(jnp.bfloat16)
    bq_p = jnp.pad(bq.reshape(1, HD), ((0, 0), (0, HDp - HD))).astype(jnp.float32)
    bk_p = jnp.pad(bk.reshape(1, HD), ((0, 0), (0, HDp - HD))).astype(jnp.float32)

    # Block-diagonal head-sum selector (zero padded rows / padded head columns).
    sel_np = np.zeros((HDp, Hp), np.float32)
    for h in range(n_head):
        sel_np[h * d_hidden:(h + 1) * d_hidden, h] = 1.0
    sel = jnp.asarray(sel_np, dtype=jnp.bfloat16)

    tL = _choose_tile_l(L, N, Dp, HDp, Hp)
    grid = (B, L // tL)
    vmem_limit = _vmem_limit_bytes(N, tL, Dp, HDp, Hp)

    scale = 1.0 / math.sqrt(d_hidden)
    kernel = functools.partial(_seq_weight_kernel, scale=scale)

    out = pl.pallas_call(
        kernel,
        out_shape=jax.ShapeDtypeStruct((B, N, Hp, L), jnp.float32),
        grid_spec=pltpu.PrefetchScalarGridSpec(
            num_scalar_prefetch=0,
            grid=grid,
            in_specs=[
                pl.BlockSpec((1, N, tL, Dp), lambda b, t: (b, 0, t, 0)),
                pl.BlockSpec((Dp, HDp), lambda b, t: (0, 0)),
                pl.BlockSpec((1, HDp), lambda b, t: (0, 0)),
                pl.BlockSpec((Dp, HDp), lambda b, t: (0, 0)),
                pl.BlockSpec((1, HDp), lambda b, t: (0, 0)),
                pl.BlockSpec((HDp, Hp), lambda b, t: (0, 0)),
            ],
            out_specs=pl.BlockSpec((1, N, Hp, tL), lambda b, t: (b, 0, 0, t)),
        ),
        compiler_params=pltpu.CompilerParams(
            dimension_semantics=("parallel", "parallel"),
            vmem_limit_bytes=vmem_limit),
    )(msa_p, wq_p, bq_p, wk_p, bk_p, sel)

    # (B, N, Hp, L) -> (B, N, L, n_head, 1), drop padded heads; layout plumbing in XLA.
    return jnp.transpose(out[:, :, :n_head, :], (0, 1, 3, 2))[..., None]


# ------------------------- reference (pure JAX) --------------------------------
def sequence_weight_reference(msa, params, *, n_head, d_hidden):
    wq, bq, wk, bk = params
    B, N, L, _ = msa.shape
    scale = 1.0 / math.sqrt(d_hidden)
    tar = msa[:, 0]                                                    # (B, L, d_msa)
    q = (tar @ wq + bq).reshape(B, 1, L, n_head, d_hidden) * scale
    k = (msa @ wk + bk).reshape(B, N, L, n_head, d_hidden)
    attn = jnp.einsum('bqihd,bkihd->bkihq', q, k)                      # (B,N,L,H,1)
    return jax.nn.softmax(attn, axis=1)


# ---------------------------------- main ---------------------------------------
def _xavier_uniform(key, shape_out_in):
    # PyTorch xavier_uniform_ on a Linear weight of shape (out, in)
    fan_out, fan_in = shape_out_in
    bound = math.sqrt(6.0 / (fan_in + fan_out))
    return jax.random.uniform(key, shape_out_in, jnp.float32, -bound, bound)


if __name__ == "__main__":
    # Small, module-consistent shapes.
    B, N, L = 2, 8, 16
    d_msa, n_head, d_hidden = 32, 4, 16
    HD = n_head * d_hidden

    root = jax.random.PRNGKey(0)
    kwq, kbq, kwk, kbk, kx = jax.random.split(root, 5)

    # PyTorch Linear weights are (out, in); transpose for x @ W.
    wq = _xavier_uniform(kwq, (HD, d_msa)).T            # (d_msa, HD)
    wk = _xavier_uniform(kwk, (HD, d_msa)).T            # (d_msa, HD)
    bb = 1.0 / math.sqrt(d_msa)                         # default Linear bias init range
    bq = jax.random.uniform(kbq, (HD,), jnp.float32, -bb, bb)
    bk = jax.random.uniform(kbk, (HD,), jnp.float32, -bb, bb)
    params = (wq, bq, wk, bk)

    msa = jax.random.normal(kx, (B, N, L, d_msa), jnp.float32)

    out = sequence_weight_forward(msa, params, n_head=n_head, d_hidden=d_hidden)
    out = jax.block_until_ready(out)

    ref = sequence_weight_reference(msa, params, n_head=n_head, d_hidden=d_hidden)
    ref = jax.block_until_ready(ref)

    # Tolerance sized for bf16 MXU operands (outputs are softmax probabilities in [0, 1],
    # so absolute tolerance dominates); normalization is exact in this version.
    np.testing.assert_allclose(np.asarray(out), np.asarray(ref), rtol=3e-2, atol=3e-2)
    print("KERNEL_OK")
</pallas_src>

<mosaic_0001>
module attributes {stable_mosaic.version = 11 : i64} {
  func.func @_seq_weight_kernel(%arg0: i32, %arg1: i32, %arg2: memref<1x8x16x128xbf16, #tpu.memory_space<vmem>>, %arg3: memref<128x128xbf16, #tpu.memory_space<vmem>>, %arg4: memref<1x128xf32, #tpu.memory_space<vmem>>, %arg5: memref<128x128xbf16, #tpu.memory_space<vmem>>, %arg6: memref<1x128xf32, #tpu.memory_space<vmem>>, %arg7: memref<128x8xbf16, #tpu.memory_space<vmem>>, %arg8: memref<1x8x8x16xf32, #tpu.memory_space<vmem>>) attributes {dimension_semantics = [#tpu.dimension_semantics<parallel>, #tpu.dimension_semantics<parallel>], iteration_bounds = array<i64: 2, 1>, scalar_prefetch = 0 : i64, scratch_operands = 0 : i64, tpu.core_type = #tpu.core_type<tc>, window_params = [{transform_indices = @transform_0, window_bounds = array<i64: 1, 8, 16, 128>}, {pipeline_mode = #tpu.pipeline_mode<synchronous>, transform_indices = @transform_1, window_bounds = array<i64: 128, 128>}, {pipeline_mode = #tpu.pipeline_mode<synchronous>, transform_indices = @transform_2, window_bounds = array<i64: 1, 128>}, {pipeline_mode = #tpu.pipeline_mode<synchronous>, transform_indices = @transform_3, window_bounds = array<i64: 128, 128>}, {pipeline_mode = #tpu.pipeline_mode<synchronous>, transform_indices = @transform_4, window_bounds = array<i64: 1, 128>}, {pipeline_mode = #tpu.pipeline_mode<synchronous>, transform_indices = @transform_5, window_bounds = array<i64: 128, 8>}, {transform_indices = @transform_6, window_bounds = array<i64: 1, 8, 8, 16>}]} {
    %c0 = arith.constant 0 : index
    %c0_0 = arith.constant 0 : index
    %c0_1 = arith.constant 0 : index
    %c0_2 = arith.constant 0 : index
    %0 = vector.load %arg2[%c0, %c0_0, %c0_1, %c0_2] : memref<1x8x16x128xbf16, #tpu.memory_space<vmem>>, vector<1x8x16x128xbf16>
    %1 = vector.shape_cast %0 : vector<1x8x16x128xbf16> to vector<8x16x128xbf16>
    %2 = vector.shape_cast %1 : vector<8x16x128xbf16> to vector<128x128xbf16>
    %c0_3 = arith.constant 0 : index
    %c0_4 = arith.constant 0 : index
    %3 = vector.load %arg5[%c0_3, %c0_4] : memref<128x128xbf16, #tpu.memory_space<vmem>>, vector<128x128xbf16>
    %cst = arith.constant dense<0.000000e+00> : vector<128x128xf32>
    %4 = tpu.matmul %2, %3, %cst {dimension_numbers = #tpu.dot_dimension_numbers<[1], [0], [0], [1], [0, 0, 1, 1], [], []>} : vector<128x128xbf16>, vector<128x128xbf16>, vector<128x128xf32> -> vector<128x128xf32>
    %c0_5 = arith.constant 0 : index
    %c0_6 = arith.constant 0 : index
    %5 = vector.load %arg6[%c0_5, %c0_6] : memref<1x128xf32, #tpu.memory_space<vmem>>, vector<1x128xf32>
    %6 = vector.broadcast %5 : vector<1x128xf32> to vector<128x128xf32>
    %7 = arith.addf %4, %6 : vector<128x128xf32>
    %8 = vector.extract_strided_slice %1 {offsets = [0, 0, 0], sizes = [1, 16, 128], strides = [1, 1, 1]} : vector<8x16x128xbf16> to vector<1x16x128xbf16>
    %9 = vector.shape_cast %8 : vector<1x16x128xbf16> to vector<16x128xbf16>
    %c0_7 = arith.constant 0 : index
    %c0_8 = arith.constant 0 : index
    %10 = vector.load %arg3[%c0_7, %c0_8] : memref<128x128xbf16, #tpu.memory_space<vmem>>, vector<128x128xbf16>
    %cst_9 = arith.constant dense<0.000000e+00> : vector<16x128xf32>
    %11 = tpu.matmul %9, %10, %cst_9 {dimension_numbers = #tpu.dot_dimension_numbers<[1], [0], [0], [1], [0, 0, 1, 1], [], []>} : vector<16x128xbf16>, vector<128x128xbf16>, vector<16x128xf32> -> vector<16x128xf32>
    %c0_10 = arith.constant 0 : index
    %c0_11 = arith.constant 0 : index
    %12 = vector.load %arg4[%c0_10, %c0_11] : memref<1x128xf32, #tpu.memory_space<vmem>>, vector<1x128xf32>
    %13 = vector.broadcast %12 : vector<1x128xf32> to vector<16x128xf32>
    %14 = arith.addf %11, %13 : vector<16x128xf32>
    %cst_12 = arith.constant 2.500000e-01 : f32
    %15 = vector.broadcast %cst_12 : f32 to vector<16x128xf32>
    %16 = arith.mulf %14, %15 : vector<16x128xf32>
    %17 = vector.shape_cast %7 : vector<128x128xf32> to vector<8x16x128xf32>
    %18 = vector.shape_cast %16 : vector<16x128xf32> to vector<1x16x128xf32>
    %19 = vector.broadcast %18 : vector<1x16x128xf32> to vector<8x16x128xf32>
    %20 = arith.mulf %17, %19 : vector<8x16x128xf32>
    %21 = arith.truncf %20 : vector<8x16x128xf32> to vector<8x16x128xbf16>
    %22 = vector.shape_cast %21 : vector<8x16x128xbf16> to vector<128x128xbf16>
    %c0_13 = arith.constant 0 : index
    %c0_14 = arith.constant 0 : index
    %23 = vector.load %arg7[%c0_13, %c0_14] : memref<128x8xbf16, #tpu.memory_space<vmem>>, vector<128x8xbf16>
    %cst_15 = arith.constant dense<0.000000e+00> : vector<128x8xf32>
    %24 = tpu.matmul %22, %23, %cst_15 {dimension_numbers = #tpu.dot_dimension_numbers<[1], [0], [0], [1], [0, 0, 1, 1], [], []>} : vector<128x128xbf16>, vector<128x8xbf16>, vector<128x8xf32> -> vector<128x8xf32>
    %25 = vector.shape_cast %24 : vector<128x8xf32> to vector<8x16x8xf32>
    %26 = tpu.transpose %25, [0, 2, 1] : vector<8x16x8xf32> -> vector<8x8x16xf32>
    %cst_16 = arith.constant dense<0xFF800000> : vector<8x16xf32>
    %27 = vector.multi_reduction <maximumf>, %26, %cst_16 [0] : vector<8x8x16xf32> to vector<8x16xf32>
    %28 = vector.shape_cast %27 : vector<8x16xf32> to vector<1x8x16xf32>
    %29 = vector.broadcast %28 : vector<1x8x16xf32> to vector<8x8x16xf32>
    %30 = arith.subf %26, %29 : vector<8x8x16xf32>
    %31 = math.exp %30 : vector<8x8x16xf32>
    %cst_17 = arith.constant dense<0.000000e+00> : vector<8x16xf32>
    %32 = vector.multi_reduction <add>, %31, %cst_17 [0] : vector<8x8x16xf32> to vector<8x16xf32>
    %33 = vector.shape_cast %32 : vector<8x16xf32> to vector<1x8x16xf32>
    %34 = vector.broadcast %33 : vector<1x8x16xf32> to vector<8x8x16xf32>
    %35 = arith.divf %31, %34 : vector<8x8x16xf32>
    %c0_18 = arith.constant 0 : index
    %c0_19 = arith.constant 0 : index
    %c0_20 = arith.constant 0 : index
    %c0_21 = arith.constant 0 : index
    %36 = vector.load %arg8[%c0_18, %c0_19, %c0_20, %c0_21] : memref<1x8x8x16xf32, #tpu.memory_space<vmem>>, vector<1x8x8x16xf32>
    %37 = vector.shape_cast %36 : vector<1x8x8x16xf32> to vector<8x8x16xf32>
    %38 = vector.shape_cast %35 : vector<8x8x16xf32> to vector<1x8x8x16xf32>
    tpu.vector_store %arg8[%c0_18, %c0_19, %c0_20, %c0_21], %38 {strides = array<i32>} : memref<1x8x8x16xf32, #tpu.memory_space<vmem>>, vector<1x8x8x16xf32>,
    return
  }
  func.func @transform_0(%arg0: i32, %arg1: i32) -> (i32, i32, i32, i32) {
    %c0_i32 = arith.constant 0 : i32
    %c0_i32_0 = arith.constant 0 : i32
    %c0_i32_1 = arith.constant 0 : i32
    return %arg0, %c0_i32, %arg1, %c0_i32_0 : i32, i32, i32, i32
  }
  func.func @transform_1(%arg0: i32, %arg1: i32) -> (i32, i32) {
    %c0_i32 = arith.constant 0 : i32
    %c0_i32_0 = arith.constant 0 : i32
    %c0_i32_1 = arith.constant 0 : i32
    return %c0_i32, %c0_i32_0 : i32, i32
  }
  func.func @transform_2(%arg0: i32, %arg1: i32) -> (i32, i32) {
    %c0_i32 = arith.constant 0 : i32
    %c0_i32_0 = arith.constant 0 : i32
    %c0_i32_1 = arith.constant 0 : i32
    return %c0_i32, %c0_i32_0 : i32, i32
  }
  func.func @transform_3(%arg0: i32, %arg1: i32) -> (i32, i32) {
    %c0_i32 = arith.constant 0 : i32
    %c0_i32_0 = arith.constant 0 : i32
    %c0_i32_1 = arith.constant 0 : i32
    return %c0_i32, %c0_i32_0 : i32, i32
  }
  func.func @transform_4(%arg0: i32, %arg1: i32) -> (i32, i32) {
    %c0_i32 = arith.constant 0 : i32
    %c0_i32_0 = arith.constant 0 : i32
    %c0_i32_1 = arith.constant 0 : i32
    return %c0_i32, %c0_i32_0 : i32, i32
  }
  func.func @transform_5(%arg0: i32, %arg1: i32) -> (i32, i32) {
    %c0_i32 = arith.constant 0 : i32
    %c0_i32_0 = arith.constant 0 : i32
    %c0_i32_1 = arith.constant 0 : i32
    return %c0_i32, %c0_i32_0 : i32, i32
  }
  func.func @transform_6(%arg0: i32, %arg1: i32) -> (i32, i32, i32, i32) {
    %c0_i32 = arith.constant 0 : i32
    %c0_i32_0 = arith.constant 0 : i32
    %c0_i32_1 = arith.constant 0 : i32
    return %arg0, %c0_i32, %c0_i32_0, %arg1 : i32, i32, i32, i32
  }
}

</mosaic_0001>

<llo_original>
// kernel: tpu_custom_call.1
$region0: #{tpu_custom_call.1}
  #allocation0 [shape = 'u32[]', space=smem, size = 0x4, offset = 0x4, fixed_abs, tag = 'smem constant byte address 0x4 - core index']
  #allocation1 [shape = 'u32[144,128]{1,0:T(1,128)}', space=vmem, size = 0x12000, scoped, tag = 'internal scratch']
  %s0 = inlined_call_operand.hbm [shape: bf16[2,8,16,128], index: 0, kind: input, shape index: {}]
  %s1 = inlined_call_operand.vmem [shape: bf16[128,128], index: 1, kind: input, shape index: {}]
  %s2 = inlined_call_operand.vmem [shape: f32[1,128], index: 2, kind: input, shape index: {}]
  %s3 = inlined_call_operand.hbm [shape: bf16[128,128], index: 3, kind: input, shape index: {}]
  %s4 = inlined_call_operand.vmem [shape: f32[1,128], index: 4, kind: input, shape index: {}]
  %s5 = inlined_call_operand.vmem [shape: bf16[128,8], index: 5, kind: input, shape index: {}]
  %s6 = inlined_call_operand.hbm [shape: f32[2,8,8,16], index: 6, kind: output, shape index: {}]
  %s7 = sld [smem:[#allocation0]]
  $region65: #{tpu_custom_call.1} parent=0
    _
  %s9 = ssub.s32 1, %s7
  %s10 = scalar_select 0, %s9, %s7
  $region1: #{tpu_custom_call.1} parent=0
    #allocation2 [shape = 'u8[65536]{0}', space=vmem, size = 0x10000, scoped, tag = 'input window, operand 0']
    #allocation3 [shape = 's32[2]{0}', space=sflag, size = 0x8, scoped, tag = 'scoped memory for tpu_custom_call.1']
    #allocation4 [shape = 's32[2]{0}', space=sflag, size = 0x8, scoped, tag = 'scoped memory for tpu_custom_call.1']
    #allocation5 [shape = 'u8[32768]{0}', space=vmem, size = 0x8000, scoped, tag = 'input window, operand 3, single buffered']
    #allocation6 [shape = 's32[1]{0}', space=sflag, size = 0x4, scoped, tag = 'scoped memory for tpu_custom_call.1']
    #allocation7 [shape = 'u8[65536]{0}', space=vmem, size = 0x10000, scoped, tag = 'output window, operand 0']
    %11 = vsyncpa [#allocation3], 0
    %s12 = scalar_lea.sflag [#allocation3], 1
    %13 = vsyncpa %s12, 0
    %14 = vsyncpa [#allocation6], 0
    %15 = vsyncpa [#allocation4], 0
    %s16 = scalar_lea.sflag [#allocation4], 1
    %17 = vsyncpa %s16, 0
    loop: start=0, step=1, limit=4
    $region2: #{tpu_custom_call.1} parent=1 // loop_pre_header
      _
    $region3: #{tpu_custom_call.1} parent=1 // loop_header
      %s19 = sphi 0, %s23
      %p20 = scmp.ge.s32.totalorder %s19, 4
      %s26 = sphi 0, %s38
      %s27 = sphi 0, %s34
      %s28 = sphi 0, %s26
      %s29 = sphi 0, %s27
      %s30 = sphi 0, %s28
      %s31 = sphi 0, %s29
      %s43 = sphi 0, %s45
      %s46 = sphi 0, %s43
      %s47 = sphi 0, %s46
      %s63 = sphi 0, %s47
      %s67 = sphi 0, %s67
      %s69 = sphi 0, %s67
      %s70 = sphi 0, %s69
      %s84 = sphi 0, %s70
      %s88 = sphi 0, %s88
      %s90 = sphi 0, %s88
      %s91 = sphi 0, %s90
      %s105 = sphi 0, %s91
      %s109 = sphi 0, %s109
      %s111 = sphi 0, %s109
      %s112 = sphi 0, %s111
      %s126 = sphi 0, %s112
      %s130 = sphi 0, %s130
      %s132 = sphi 0, %s130
      %s133 = sphi 0, %s132
      %s147 = sphi 0, %s133
      %s151 = sphi 0, %s151
      %s153 = sphi 0, %s151
      %s154 = sphi 0, %s153
      %s168 = sphi 0, %s154
      %s176 = sphi 0, %s178
      %s179 = sphi 0, %s176
      %s180 = sphi 0, %s179
      %s196 = sphi 0, %s180
    $region4: #{tpu_custom_call.1} parent=1 // loop_header_branch
      %22 = sbr.rel (%p20) target = $region8
    $region5: #{tpu_custom_call.1} parent=1 // loop_body
      %s24 = ssub.s32 %s19, 1
      %s25 = ssub.s32 %s19, 2
      %s32 = sadd.s32 1, %s27
      %p33 = scmp.ge.s32.totalorder %s32, 1
      %s34 = scalar_select %p33, 0, %s32
      %s35 = sadd.s32 1, %s26
      %s36 = scalar_select %p33, %s35, %s26
      %p37 = scmp.ge.s32.totalorder %s36, 2
      %s38 = scalar_select %p37, 0, %s36
      %s39 = ssub.s32 %s26, %s38
      %s40 = ssub.s32 %s27, %s34
      %s41 = sor.u32 %s39, %s40
      %p42 = scmp.eq.s32.totalorder %s41, 0
      %s44 = sadd.s32 %s43, 1
      %s45 = scalar_select %p42, %s43, %s44
      %p48 = pneg %p42
      %p49 = scmp.eq.s32.totalorder %s19, 1
      %p50 = por %p48, %p49
      %p51 = scmp.ne.s32.totalorder %s43, %s46
      %p52 = scmp.eq.s32.totalorder %s19, 0
      %p53 = por %p51, %p52
      %p54 = scmp.ne.s32.totalorder %s43, %s46
      %p55 = scmp.eq.s32.totalorder %s24, 1
      %p56 = por %p54, %p55
      %p57 = scmp.ne.s32.totalorder %s46, %s47
      %p58 = scmp.eq.s32.totalorder %s24, 0
      %p59 = por %p57, %p58
      %p60 = scmp.ne.s32.totalorder %s46, %s47
      %p61 = scmp.eq.s32.totalorder %s25, 1
      %p62 = por %p60, %p61
      %p64 = scmp.ne.s32.totalorder %s47, %s63
      %p65 = scmp.eq.s32.totalorder %s25, 0
      %p66 = por %p64, %p65
      %s68 = sadd.s32 %s67, 1
      %p71 = scmp.eq.s32.totalorder %s19, 1
      %p72 = scmp.ne.s32.totalorder %s67, %s69
      %p73 = scmp.eq.s32.totalorder %s19, 0
      %p74 = por %p72, %p73
      %p75 = scmp.ne.s32.totalorder %s67, %s69
      %p76 = scmp.eq.s32.totalorder %s24, 1
      %p77 = por %p75, %p76
      %p78 = scmp.ne.s32.totalorder %s69, %s70
      %p79 = scmp.eq.s32.totalorder %s24, 0
      %p80 = por %p78, %p79
      %p81 = scmp.ne.s32.totalorder %s69, %s70
      %p82 = scmp.eq.s32.totalorder %s25, 1
      %p83 = por %p81, %p82
      %p85 = scmp.ne.s32.totalorder %s70, %s84
      %p86 = scmp.eq.s32.totalorder %s25, 0
      %p87 = por %p85, %p86
      %s89 = sadd.s32 %s88, 1
      %p92 = scmp.eq.s32.totalorder %s19, 1
      %p93 = scmp.ne.s32.totalorder %s88, %s90
      %p94 = scmp.eq.s32.totalorder %s19, 0
      %p95 = por %p93, %p94
      %p96 = scmp.ne.s32.totalorder %s88, %s90
      %p97 = scmp.eq.s32.totalorder %s24, 1
      %p98 = por %p96, %p97
      %p99 = scmp.ne.s32.totalorder %s90, %s91
      %p100 = scmp.eq.s32.totalorder %s24, 0
      %p101 = por %p99, %p100
      %p102 = scmp.ne.s32.totalorder %s90, %s91
      %p103 = scmp.eq.s32.totalorder %s25, 1
      %p104 = por %p102, %p103
      %p106 = scmp.ne.s32.totalorder %s91, %s105
      %p107 = scmp.eq.s32.totalorder %s25, 0
      %p108 = por %p106, %p107
      %s110 = sadd.s32 %s109, 1
      %p113 = scmp.eq.s32.totalorder %s19, 1
      %p114 = scmp.ne.s32.totalorder %s109, %s111
      %p115 = scmp.eq.s32.totalorder %s19, 0
      %p116 = por %p114, %p115
      %p117 = scmp.ne.s32.totalorder %s109, %s111
      %p118 = scmp.eq.s32.totalorder %s24, 1
      %p119 = por %p117, %p118
      %p120 = scmp.ne.s32.totalorder %s111, %s112
      %p121 = scmp.eq.s32.totalorder %s24, 0
      %p122 = por %p120, %p121
      %p123 = scmp.ne.s32.totalorder %s111, %s112
      %p124 = scmp.eq.s32.totalorder %s25, 1
      %p125 = por %p123, %p124
      %p127 = scmp.ne.s32.totalorder %s112, %s126
      %p128 = scmp.eq.s32.totalorder %s25, 0
      %p129 = por %p127, %p128
      %s131 = sadd.s32 %s130, 1
      %p134 = scmp.eq.s32.totalorder %s19, 1
      %p135 = scmp.ne.s32.totalorder %s130, %s132
      %p136 = scmp.eq.s32.totalorder %s19, 0
      %p137 = por %p135, %p136
      %p138 = scmp.ne.s32.totalorder %s130, %s132
      %p139 = scmp.eq.s32.totalorder %s24, 1
      %p140 = por %p138, %p139
      %p141 = scmp.ne.s32.totalorder %s132, %s133
      %p142 = scmp.eq.s32.totalorder %s24, 0
      %p143 = por %p141, %p142
      %p144 = scmp.ne.s32.totalorder %s132, %s133
      %p145 = scmp.eq.s32.totalorder %s25, 1
      %p146 = por %p144, %p145
      %p148 = scmp.ne.s32.totalorder %s133, %s147
      %p149 = scmp.eq.s32.totalorder %s25, 0
      %p150 = por %p148, %p149
      %s152 = sadd.s32 %s151, 1
      %p155 = scmp.eq.s32.totalorder %s19, 1
      %p156 = scmp.ne.s32.totalorder %s151, %s153
      %p157 = scmp.eq.s32.totalorder %s19, 0
      %p158 = por %p156, %p157
      %p159 = scmp.ne.s32.totalorder %s151, %s153
      %p160 = scmp.eq.s32.totalorder %s24, 1
      %p161 = por %p159, %p160
      %p162 = scmp.ne.s32.totalorder %s153, %s154
      %p163 = scmp.eq.s32.totalorder %s24, 0
      %p164 = por %p162, %p163
      %p165 = scmp.ne.s32.totalorder %s153, %s154
      %p166 = scmp.eq.s32.totalorder %s25, 1
      %p167 = por %p165, %p166
      %p169 = scmp.ne.s32.totalorder %s154, %s168
      %p170 = scmp.eq.s32.totalorder %s25, 0
      %p171 = por %p169, %p170
      %s172 = ssub.s32 %s26, %s38
      %s173 = ssub.s32 %s27, %s34
      %s174 = sor.u32 %s172, %s173
      %p175 = scmp.eq.s32.totalorder %s174, 0
      %s177 = sadd.s32 %s176, 1
      %s178 = scalar_select %p175, %s176, %s177
      %p181 = pneg %p175
      %p182 = scmp.eq.s32.totalorder %s19, 1
      %p183 = por %p181, %p182
      %p184 = scmp.ne.s32.totalorder %s176, %s179
      %p185 = scmp.eq.s32.totalorder %s19, 0
      %p186 = por %p184, %p185
      %p187 = scmp.ne.s32.totalorder %s176, %s179
      %p188 = scmp.eq.s32.totalorder %s24, 1
      %p189 = por %p187, %p188
      %p190 = scmp.ne.s32.totalorder %s179, %s180
      %p191 = scmp.eq.s32.totalorder %s24, 0
      %p192 = por %p190, %p191
      %p193 = scmp.ne.s32.totalorder %s179, %s180
      %p194 = scmp.eq.s32.totalorder %s25, 1
      %p195 = por %p193, %p194
      %p197 = scmp.ne.s32.totalorder %s180, %s196
      %p198 = scmp.eq.s32.totalorder %s25, 0
      %p199 = por %p197, %p198
      %p200 = scmp.le.s32.totalorder 1, %s19
      %p201 = scmp.lt.s32.totalorder %s19, 3
      %p202 = pnand %p200, %p201
      %p203 = pneg %p202
      // Predicated region
      $region9: #{tpu_custom_call.1} parent=5 // pred_check
        _
      $region10: #{tpu_custom_call.1} parent=5 // pred_check_branch
        %205 = sbr.rel (%p202) target = $region12
      $region11: #{tpu_custom_call.1} parent=5 // pred_region
        %s206 = ssub.s32 %s19, 1
        // Predicated region
        $region13: #{tpu_custom_call.1} parent=11 // pred_check
          %p207 = pneg %p80
        $region14: #{tpu_custom_call.1} parent=11 // pred_check_branch
          %209 = sbr.rel (%p207) target = $region16
        $region15: #{tpu_custom_call.1} parent=11 // pred_region
          _
        $region16: #{tpu_custom_call.1} parent=11 // pred_fallthru
          _
        // Predicated region
        $region17: #{tpu_custom_call.1} parent=11 // pred_check
          %p210 = pneg %p101
        $region18: #{tpu_custom_call.1} parent=11 // pred_check_branch
          %212 = sbr.rel (%p210) target = $region20
        $region19: #{tpu_custom_call.1} parent=11 // pred_region
          _
        $region20: #{tpu_custom_call.1} parent=11 // pred_fallthru
          _
        // Predicated region
        $region21: #{tpu_custom_call.1} parent=11 // pred_check
          %p213 = pneg %p122
        $region22: #{tpu_custom_call.1} parent=11 // pred_check_branch
          %215 = sbr.rel (%p213) target = $region24
        $region23: #{tpu_custom_call.1} parent=11 // pred_region
          %s217 = ssub.s32 1024, 1024
          %218 = vsyncadd [#allocation6], %s217
          %s219 = sshll.u32 [#allocation5], 4
          %s220 = int_to_ptr.vmem [resolvable:$true] %s219
          %225 = dma.hbm_to_vmem [thread:$0]  %s3, 1024, %s220, [#allocation6], 64, 64, 4
        $region24: #{tpu_custom_call.1} parent=11 // pred_fallthru
          _
        // Predicated region
        $region25: #{tpu_custom_call.1} parent=11 // pred_check
          %p226 = pneg %p143
        $region26: #{tpu_custom_call.1} parent=11 // pred_check_branch
          %228 = sbr.rel (%p226) target = $region28
        $region27: #{tpu_custom_call.1} parent=11 // pred_region
          _
        $region28: #{tpu_custom_call.1} parent=11 // pred_fallthru
          _
        // Predicated region
        $region29: #{tpu_custom_call.1} parent=11 // pred_check
          %p229 = pneg %p164
        $region30: #{tpu_custom_call.1} parent=11 // pred_check_branch
          %231 = sbr.rel (%p229) target = $region32
        $region31: #{tpu_custom_call.1} parent=11 // pred_region
          _
        $region32: #{tpu_custom_call.1} parent=11 // pred_fallthru
          _
      $region12: #{tpu_custom_call.1} parent=5 // pred_fallthru
        _
      %p232 = scmp.lt.s32.totalorder %s19, 2
      // Predicated region
      $region33: #{tpu_custom_call.1} parent=5 // pred_check
        %p233 = pneg %p232
      $region34: #{tpu_custom_call.1} parent=5 // pred_check_branch
        %235 = sbr.rel (%p233) target = $region36
      $region35: #{tpu_custom_call.1} parent=5 // pred_region
        // Predicated region
        $region37: #{tpu_custom_call.1} parent=35 // pred_check
          %p236 = pneg %p53
        $region38: #{tpu_custom_call.1} parent=35 // pred_check_branch
          %238 = sbr.rel (%p236) target = $region40
        $region39: #{tpu_custom_call.1} parent=35 // pred_region
          %s239 = sand.u32 %s43, 1
          %s240 = scalar_lea.sflag [#allocation3], %s239
          %s241 = sand.u32 %s43, 1
          %s242 = smul.addr %s241, 64
          %s243 = scalar_lea.vmem [#allocation2], %s242
          %s244 = smul.u32 2, %s27
          %s246 = ssub.s32 1024, 1024
          %247 = vsyncadd %s240, %s246
          %s248 = smul.addr %s26, 16
          %s249 = sadd.s32 %s244, %s248
          %s250 = smul.addr %s249, 64
          %s251 = scalar_lea.hbm %s0, %s250
          %s252 = sshll.u32 %s243, 4
          %s253 = int_to_ptr.vmem [resolvable:$true] %s252
          %258 = dma.hbm_to_vmem [thread:$0]  %s251, 1024, %s253, %s240, 64, 64, 4
        $region40: #{tpu_custom_call.1} parent=35 // pred_fallthru
          _
      $region36: #{tpu_custom_call.1} parent=5 // pred_fallthru
        _
      %p259 = scmp.le.s32.totalorder 1, %s19
      %p260 = scmp.lt.s32.totalorder %s19, 3
      %p261 = pnand %p259, %p260
      %p262 = pneg %p261
      // Predicated region
      $region41: #{tpu_custom_call.1} parent=5 // pred_check
        _
      $region42: #{tpu_custom_call.1} parent=5 // pred_check_branch
        %264 = sbr.rel (%p261) target = $region44
      $region43: #{tpu_custom_call.1} parent=5 // pred_region
        %s265 = ssub.s32 %s19, 1
        %s266 = sand.u32 %s46, 1
        %s267 = scalar_lea.sflag [#allocation3], %s266
        %s268 = sand.u32 %s46, 1
        %s269 = smul.addr %s268, 64
        %s270 = scalar_lea.vmem [#allocation2], %s269
        // Predicated region
        $region45: #{tpu_custom_call.1} parent=43 // pred_check
          %p271 = pneg %p59
        $region46: #{tpu_custom_call.1} parent=43 // pred_check_branch
          %273 = sbr.rel (%p271) target = $region48
        $region47: #{tpu_custom_call.1} parent=43 // pred_region
          %274 = dma.done %s267, 1024
        $region48: #{tpu_custom_call.1} parent=43 // pred_fallthru
          _
        // Predicated region
        $region49: #{tpu_custom_call.1} parent=43 // pred_check
          %p275 = pneg %p122
        $region50: #{tpu_custom_call.1} parent=43 // pred_check_branch
          %277 = sbr.rel (%p275) target = $region52
        $region51: #{tpu_custom_call.1} parent=43 // pred_region
          %278 = dma.done [#allocation6], 1024
        $region52: #{tpu_custom_call.1} parent=43 // pred_fallthru
          _
        %s279 = sand.u32 %s46, 1
        %s280 = scalar_lea.sflag [#allocation3], %s279
        %s281 = sand.u32 %s46, 1
        %s282 = smul.addr %s281, 64
        %s283 = scalar_lea.vmem [#allocation2], %s282
        %p284 = pneg %p59
        %p285 = pneg %p56
        %p286 = pneg %p80
        %p287 = pneg %p77
        %p288 = pneg %p101
        %p289 = pneg %p98
        %p290 = pneg %p122
        %p291 = pneg %p119
        %p292 = pneg %p143
        %p293 = pneg %p140
        %p294 = pneg %p164
        %p295 = pneg %p161
        %p296 = pneg %p192
        %p297 = pneg %p189
        %s298 = sand.u32 %s179, 1
        %s299 = scalar_lea.sflag [#allocation4], %s298
        %s300 = sand.u32 %s179, 1
        %s301 = smul.addr %s300, 64
        %s302 = scalar_lea.vmem [#allocation7], %s301
        %s303 = smul.u32 2, %s29
        %v305 = vld [vmem:[%s270] sm:$0xf]
        %v306 = vld [vmem:[%s270 + $0x4] sm:$0xf]
        %v307 = vld [vmem:[%s270 + $0x8] sm:$0xf]
        %v308 = vld [vmem:[%s270 + $0xc] sm:$0xf]
        %v309 = vld [vmem:[%s270 + $0x10] sm:$0xf]
        %v310 = vld [vmem:[%s270 + $0x14] sm:$0xf]
        %v311 = vld [vmem:[%s270 + $0x18] sm:$0xf]
        %v312 = vld [vmem:[%s270 + $0x1c] sm:$0xf]
        %v313 = vld [vmem:[%s270 + $0x20] sm:$0xf]
        %v314 = vld [vmem:[%s270 + $0x24] sm:$0xf]
        %v315 = vld [vmem:[%s270 + $0x28] sm:$0xf]
        %v316 = vld [vmem:[%s270 + $0x2c] sm:$0xf]
        %v317 = vld [vmem:[%s270 + $0x30] sm:$0xf]
        %v318 = vld [vmem:[%s270 + $0x34] sm:$0xf]
        %v319 = vld [vmem:[%s270 + $0x38] sm:$0xf]
        %v320 = vld [vmem:[%s270 + $0x3c] sm:$0xf]
        %v321 = vld [vmem:[#allocation5] sm:$0xf]
        %v322 = vld [vmem:[#allocation5 + $0x4] sm:$0xf]
        %v323 = vld [vmem:[#allocation5 + $0x8] sm:$0xf]
        %v324 = vld [vmem:[#allocation5 + $0xc] sm:$0xf]
        %v325 = vld [vmem:[#allocation5 + $0x10] sm:$0xf]
        %v326 = vld [vmem:[#allocation5 + $0x14] sm:$0xf]
        %v327 = vld [vmem:[#allocation5 + $0x18] sm:$0xf]
        %v328 = vld [vmem:[#allocation5 + $0x1c] sm:$0xf]
        %v329 = vld [vmem:[#allocation5 + $0x20] sm:$0xf]
        %v330 = vld [vmem:[#allocation5 + $0x24] sm:$0xf]
        %v331 = vld [vmem:[#allocation5 + $0x28] sm:$0xf]
        %v332 = vld [vmem:[#allocation5 + $0x2c] sm:$0xf]
        %v333 = vld [vmem:[#allocation5 + $0x30] sm:$0xf]
        %v334 = vld [vmem:[#allocation5 + $0x34] sm:$0xf]
        %v335 = vld [vmem:[#allocation5 + $0x38] sm:$0xf]
        %v336 = vld [vmem:[#allocation5 + $0x3c] sm:$0xf]
        %v337 = vld [vmem:[%s4] sm:$0x1]
        %v339 = vlaneseq
        %v340 = vshrl.u32 %v339, 7
        %v341 = vsub.s32 0, %v340
        %v342 = vrot.slane %v337, %v341
        %v360 = vunpack.c.l.b16 %v305
        %v361 = vunpack.c.l.b16 %v306
        %v362 = vunpack.c.l.b16 %v307
        %v363 = vunpack.c.l.b16 %v308
        %v364 = vunpack.c.l.b16 %v309
        %v365 = vunpack.c.l.b16 %v310
        %v366 = vunpack.c.l.b16 %v311
        %v367 = vunpack.c.l.b16 %v312
        %v368 = vunpack.c.l.b16 %v313
        %v369 = vunpack.c.l.b16 %v314
        %v370 = vunpack.c.l.b16 %v315
        %v371 = vunpack.c.l.b16 %v316
        %v372 = vunpack.c.l.b16 %v317
        %v373 = vunpack.c.l.b16 %v318
        %v374 = vunpack.c.l.b16 %v319
        %v375 = vunpack.c.l.b16 %v320
        %v376 = vpack.c.b16 %v361, %v360
        %v377 = vpack.c.b16 %v363, %v362
        %v378 = vpack.c.b16 %v365, %v364
        %v379 = vpack.c.b16 %v367, %v366
        %v380 = vpack.c.b16 %v369, %v368
        %v381 = vpack.c.b16 %v371, %v370
        %v382 = vpack.c.b16 %v373, %v372
        %v383 = vpack.c.b16 %v375, %v374
        %v408 = vunpack.c.l.b16 %v321
        %v409 = vunpack.c.l.b16 %v322
        %v410 = vunpack.c.l.b16 %v323
        %v411 = vunpack.c.l.b16 %v324
        %v412 = vunpack.c.l.b16 %v325
        %v413 = vunpack.c.l.b16 %v326
        %v414 = vunpack.c.l.b16 %v327
        %v415 = vunpack.c.l.b16 %v328
        %v416 = vunpack.c.l.b16 %v329
        %v417 = vunpack.c.l.b16 %v330
        %v418 = vunpack.c.l.b16 %v331
        %v419 = vunpack.c.l.b16 %v332
        %v420 = vunpack.c.l.b16 %v333
        %v421 = vunpack.c.l.b16 %v334
        %v422 = vunpack.c.l.b16 %v335
        %v423 = vunpack.c.l.b16 %v336
        %v424 = vpack.c.b16 %v409, %v408
        %v425 = vpack.c.b16 %v411, %v410
        %v426 = vpack.c.b16 %v413, %v412
        %v427 = vpack.c.b16 %v415, %v414
        %v428 = vpack.c.b16 %v417, %v416
        %v429 = vpack.c.b16 %v419, %v418
        %v430 = vpack.c.b16 %v421, %v420
        %v431 = vpack.c.b16 %v423, %v422
        %440 = vmatprep.subr.bf16.mxu0 0
        %441 = vmatpush1.bf16.msra.mxu0 %v431
        %442 = vmatprep.subr.bf16.mxu0 0
        %443 = vmatpush1.bf16.msra.mxu0 %v430
        %444 = vmatprep.subr.bf16.mxu0 0
        %445 = vmatpush1.bf16.msra.mxu0 %v429
        %446 = vmatprep.subr.bf16.mxu0 0
        %447 = vmatpush1.bf16.msra.mxu0 %v428
        %448 = vmatprep.subr.bf16.mxu0 0
        %449 = vmatpush1.bf16.msra.mxu0 %v427
        %450 = vmatprep.subr.bf16.mxu0 0
        %451 = vmatpush1.bf16.msra.mxu0 %v426
        %452 = vmatprep.subr.bf16.mxu0 0
        %453 = vmatpush1.bf16.msra.mxu0 %v425
        %454 = vmatprep.subr.bf16.mxu0 0
        %455 = vmatpush1.bf16.msra.mxu0 %v424
        %456 = vmatprep.subr.bf16.mxu0 0
        %457 = vmatpush2.bf16.msra.mxu0 0
        %458 = vmatprep.subr.bf16.mxu0 0
        %459 = vmatpush2.bf16.msra.mxu0 0
        %460 = vmatprep.subr.bf16.mxu0 0
        %461 = vmatpush2.bf16.msra.mxu0 0
        %462 = vmatprep.subr.bf16.mxu0 0
        %463 = vmatpush2.bf16.msra.mxu0 0
        %464 = vmatprep.subr.bf16.mxu0 0
        %465 = vmatpush2.bf16.msra.mxu0 0
        %466 = vmatprep.subr.bf16.mxu0 0
        %467 = vmatpush2.bf16.msra.mxu0 0
        %468 = vmatprep.subr.bf16.mxu0 0
        %469 = vmatpush2.bf16.msra.mxu0 0
        %470 = vmatprep.subr.bf16.mxu0 0
        %471 = vmatpush2.bf16.msra.mxu0 0
        %472 = vmatprep.mubr.bf16.mxu0 0
        %473 = vmatmul.mubr.bf16.gmra.mxu0 %v376
        %v474 = vpop.f32.mrf.mxu0
        %v475 = vadd.f32 %v342, %v474
        %v476 = vpop.f32.mrf.mxu0
        %v477 = vpop.f32.mrf.mxu0
        %v478 = vadd.f32 %v342, %v477
        %v479 = vpop.f32.mrf.mxu0
        %480 = vmatprep.mubr.bf16.mxu0 0
        %481 = vmatmul.mubr.bf16.gmra.mxu0 %v377
        %v482 = vpop.f32.mrf.mxu0
        %v483 = vadd.f32 %v342, %v482
        %v484 = vpop.f32.mrf.mxu0
        %v485 = vpop.f32.mrf.mxu0
        %v486 = vadd.f32 %v342, %v485
        %v487 = vpop.f32.mrf.mxu0
        %488 = vmatprep.mubr.bf16.mxu0 0
        %489 = vmatmul.mubr.bf16.gmra.mxu0 %v378
        %v490 = vpop.f32.mrf.mxu0
        %v491 = vadd.f32 %v342, %v490
        %v492 = vpop.f32.mrf.mxu0
        %v493 = vpop.f32.mrf.mxu0
        %v494 = vadd.f32 %v342, %v493
        %v495 = vpop.f32.mrf.mxu0
        %496 = vmatprep.mubr.bf16.mxu0 0
        %497 = vmatmul.mubr.bf16.gmra.mxu0 %v379
        %v498 = vpop.f32.mrf.mxu0
        %v499 = vadd.f32 %v342, %v498
        %v500 = vpop.f32.mrf.mxu0
        %v501 = vpop.f32.mrf.mxu0
        %v502 = vadd.f32 %v342, %v501
        %v503 = vpop.f32.mrf.mxu0
        %504 = vmatprep.mubr.bf16.mxu0 0
        %505 = vmatmul.mubr.bf16.gmra.mxu0 %v380
        %v506 = vpop.f32.mrf.mxu0
        %v507 = vadd.f32 %v342, %v506
        %v508 = vpop.f32.mrf.mxu0
        %v509 = vpop.f32.mrf.mxu0
        %v510 = vadd.f32 %v342, %v509
        %v511 = vpop.f32.mrf.mxu0
        %512 = vmatprep.mubr.bf16.mxu0 0
        %513 = vmatmul.mubr.bf16.gmra.mxu0 %v381
        %v514 = vpop.f32.mrf.mxu0
        %v515 = vadd.f32 %v342, %v514
        %v516 = vpop.f32.mrf.mxu0
        %v517 = vpop.f32.mrf.mxu0
        %v518 = vadd.f32 %v342, %v517
        %v519 = vpop.f32.mrf.mxu0
        %520 = vmatprep.mubr.bf16.mxu0 0
        %521 = vmatmul.mubr.bf16.gmra.mxu0 %v382
        %v522 = vpop.f32.mrf.mxu0
        %v523 = vadd.f32 %v342, %v522
        %v524 = vpop.f32.mrf.mxu0
        %v525 = vpop.f32.mrf.mxu0
        %v526 = vadd.f32 %v342, %v525
        %v527 = vpop.f32.mrf.mxu0
        %528 = vmatprep.mubr.bf16.mxu0 0
        %529 = vmatmul.mubr.bf16.gmra.mxu0 %v383
        %v530 = vpop.f32.mrf.mxu0
        %v531 = vadd.f32 %v342, %v530
        %v532 = vpop.f32.mrf.mxu0
        %v533 = vpop.f32.mrf.mxu0
        %v534 = vadd.f32 %v342, %v533
        %v535 = vpop.f32.mrf.mxu0
        %536 = vdwg.mxu0
        %v537 = vld [vmem:[%s1] sm:$0xf]
        %v538 = vld [vmem:[%s1 + $0x4] sm:$0xf]
        %v539 = vld [vmem:[%s1 + $0x8] sm:$0xf]
        %v540 = vld [vmem:[%s1 + $0xc] sm:$0xf]
        %v541 = vld [vmem:[%s1 + $0x10] sm:$0xf]
        %v542 = vld [vmem:[%s1 + $0x14] sm:$0xf]
        %v543 = vld [vmem:[%s1 + $0x18] sm:$0xf]
        %v544 = vld [vmem:[%s1 + $0x1c] sm:$0xf]
        %v545 = vld [vmem:[%s1 + $0x20] sm:$0xf]
        %v546 = vld [vmem:[%s1 + $0x24] sm:$0xf]
        %v547 = vld [vmem:[%s1 + $0x28] sm:$0xf]
        %v548 = vld [vmem:[%s1 + $0x2c] sm:$0xf]
        %v549 = vld [vmem:[%s1 + $0x30] sm:$0xf]
        %v550 = vld [vmem:[%s1 + $0x34] sm:$0xf]
        %v551 = vld [vmem:[%s1 + $0x38] sm:$0xf]
        %v552 = vld [vmem:[%s1 + $0x3c] sm:$0xf]
        %v553 = vld [vmem:[%s2] sm:$0x1]
        %v555 = vlaneseq
        %v556 = vshrl.u32 %v555, 7
        %v557 = vsub.s32 0, %v556
        %v558 = vrot.slane %v553, %v557
        %v576 = vunpack.c.l.b16 %v537
        %v577 = vunpack.c.l.b16 %v538
        %v578 = vunpack.c.l.b16 %v539
        %v579 = vunpack.c.l.b16 %v540
        %v580 = vunpack.c.l.b16 %v541
        %v581 = vunpack.c.l.b16 %v542
        %v582 = vunpack.c.l.b16 %v543
        %v583 = vunpack.c.l.b16 %v544
        %v584 = vunpack.c.l.b16 %v545
        %v585 = vunpack.c.l.b16 %v546
        %v586 = vunpack.c.l.b16 %v547
        %v587 = vunpack.c.l.b16 %v548
        %v588 = vunpack.c.l.b16 %v549
        %v589 = vunpack.c.l.b16 %v550
        %v590 = vunpack.c.l.b16 %v551
        %v591 = vunpack.c.l.b16 %v552
        %v592 = vpack.c.b16 %v577, %v576
        %v593 = vpack.c.b16 %v579, %v578
        %v594 = vpack.c.b16 %v581, %v580
        %v595 = vpack.c.b16 %v583, %v582
        %v596 = vpack.c.b16 %v585, %v584
        %v597 = vpack.c.b16 %v587, %v586
        %v598 = vpack.c.b16 %v589, %v588
        %v599 = vpack.c.b16 %v591, %v590
        %608 = vmatprep.subr.bf16.mxu0 0
        %609 = vmatpush1.bf16.msra.mxu0 %v599
        %610 = vmatprep.subr.bf16.mxu0 0
        %611 = vmatpush1.bf16.msra.mxu0 %v598
        %612 = vmatprep.subr.bf16.mxu0 0
        %613 = vmatpush1.bf16.msra.mxu0 %v597
        %614 = vmatprep.subr.bf16.mxu0 0
        %615 = vmatpush1.bf16.msra.mxu0 %v596
        %616 = vmatprep.subr.bf16.mxu0 0
        %617 = vmatpush1.bf16.msra.mxu0 %v595
        %618 = vmatprep.subr.bf16.mxu0 0
        %619 = vmatpush1.bf16.msra.mxu0 %v594
        %620 = vmatprep.subr.bf16.mxu0 0
        %621 = vmatpush1.bf16.msra.mxu0 %v593
        %622 = vmatprep.subr.bf16.mxu0 0
        %623 = vmatpush1.bf16.msra.mxu0 %v592
        %624 = vmatprep.subr.bf16.mxu0 0
        %625 = vmatpush2.bf16.msra.mxu0 0
        %626 = vmatprep.subr.bf16.mxu0 0
        %627 = vmatpush2.bf16.msra.mxu0 0
        %628 = vmatprep.subr.bf16.mxu0 0
        %629 = vmatpush2.bf16.msra.mxu0 0
        %630 = vmatprep.subr.bf16.mxu0 0
        %631 = vmatpush2.bf16.msra.mxu0 0
        %632 = vmatprep.subr.bf16.mxu0 0
        %633 = vmatpush2.bf16.msra.mxu0 0
        %634 = vmatprep.subr.bf16.mxu0 0
        %635 = vmatpush2.bf16.msra.mxu0 0
        %636 = vmatprep.subr.bf16.mxu0 0
        %637 = vmatpush2.bf16.msra.mxu0 0
        %638 = vmatprep.subr.bf16.mxu0 0
        %639 = vmatpush2.bf16.msra.mxu0 0
        %640 = vmatprep.mubr.bf16.mxu0 0
        %641 = vmatmul.mubr.bf16.gmra.mxu0 %v376
        %v642 = vpop.f32.mrf.mxu0
        %v643 = vadd.f32 %v558, %v642
        %v644 = vpop.f32.mrf.mxu0
        %v645 = vpop.f32.mrf.mxu0
        %v646 = vadd.f32 %v558, %v645
        %v647 = vpop.f32.mrf.mxu0
        %648 = vdwg.mxu0
        %v649 = vmul.f32 %v643, 0.25
        %v650 = vmul.f32 %v646, 0.25
        %v651 = vmul.f32 %v475, %v649
        %v652 = vmul.f32 %v478, %v650
        %v653 = vmul.f32 %v483, %v649
        %v654 = vmul.f32 %v486, %v650
        %v655 = vmul.f32 %v491, %v649
        %v656 = vmul.f32 %v494, %v650
        %v657 = vmul.f32 %v499, %v649
        %v658 = vmul.f32 %v502, %v650
        %v659 = vmul.f32 %v507, %v649
        %v660 = vmul.f32 %v510, %v650
        %v661 = vmul.f32 %v515, %v649
        %v662 = vmul.f32 %v518, %v650
        %v663 = vmul.f32 %v523, %v649
        %v664 = vmul.f32 %v526, %v650
        %v665 = vmul.f32 %v531, %v649
        %v666 = vmul.f32 %v534, %v650
        %v667 = vpack.c.bf16 %v652, %v651
        %v668 = vpack.c.bf16 %v654, %v653
        %v669 = vpack.c.bf16 %v656, %v655
        %v670 = vpack.c.bf16 %v658, %v657
        %v671 = vpack.c.bf16 %v660, %v659
        %v672 = vpack.c.bf16 %v662, %v661
        %v673 = vpack.c.bf16 %v664, %v663
        %v674 = vpack.c.bf16 %v666, %v665
        %v675 = vld [vmem:[%s5] sm:$0xf]
        %v676 = vld [vmem:[%s5 + $0x4] sm:$0xf]
        %v677 = vld [vmem:[%s5 + $0x8] sm:$0xf]
        %v678 = vld [vmem:[%s5 + $0xc] sm:$0xf]
        %v679 = vld [vmem:[%s5 + $0x10] sm:$0xf]
        %v680 = vld [vmem:[%s5 + $0x14] sm:$0xf]
        %v681 = vld [vmem:[%s5 + $0x18] sm:$0xf]
        %v682 = vld [vmem:[%s5 + $0x1c] sm:$0xf]
        %v683 = vld [vmem:[%s5 + $0x20] sm:$0xf]
        %v684 = vld [vmem:[%s5 + $0x24] sm:$0xf]
        %v685 = vld [vmem:[%s5 + $0x28] sm:$0xf]
        %v686 = vld [vmem:[%s5 + $0x2c] sm:$0xf]
        %v687 = vld [vmem:[%s5 + $0x30] sm:$0xf]
        %v688 = vld [vmem:[%s5 + $0x34] sm:$0xf]
        %v689 = vld [vmem:[%s5 + $0x38] sm:$0xf]
        %v690 = vld [vmem:[%s5 + $0x3c] sm:$0xf]
        %v707 = vunpack.c.l.b16 %v675
        %v708 = vunpack.c.l.b16 %v676
        %v709 = vunpack.c.l.b16 %v677
        %v710 = vunpack.c.l.b16 %v678
        %v711 = vunpack.c.l.b16 %v679
        %v712 = vunpack.c.l.b16 %v680
        %v713 = vunpack.c.l.b16 %v681
        %v714 = vunpack.c.l.b16 %v682
        %v715 = vunpack.c.l.b16 %v683
        %v716 = vunpack.c.l.b16 %v684
        %v717 = vunpack.c.l.b16 %v685
        %v718 = vunpack.c.l.b16 %v686
        %v719 = vunpack.c.l.b16 %v687
        %v720 = vunpack.c.l.b16 %v688
        %v721 = vunpack.c.l.b16 %v689
        %v722 = vunpack.c.l.b16 %v690
        %v723 = vpack.c.b16 %v708, %v707
        %v724 = vpack.c.b16 %v710, %v709
        %v725 = vpack.c.b16 %v712, %v711
        %v726 = vpack.c.b16 %v714, %v713
        %v727 = vpack.c.b16 %v716, %v715
        %v728 = vpack.c.b16 %v718, %v717
        %v729 = vpack.c.b16 %v720, %v719
        %v730 = vpack.c.b16 %v722, %v721
        %739 = vmatprep.subr.bf16.mxu0 0
        %740 = vmatpush1.bf16.msra.mxu0 %v730
        %741 = vmatprep.subr.bf16.mxu0 0
        %742 = vmatpush1.bf16.msra.mxu0 %v729
        %743 = vmatprep.subr.bf16.mxu0 0
        %744 = vmatpush1.bf16.msra.mxu0 %v728
        %745 = vmatprep.subr.bf16.mxu0 0
        %746 = vmatpush1.bf16.msra.mxu0 %v727
        %747 = vmatprep.subr.bf16.mxu0 0
        %748 = vmatpush1.bf16.msra.mxu0 %v726
        %749 = vmatprep.subr.bf16.mxu0 0
        %750 = vmatpush1.bf16.msra.mxu0 %v725
        %751 = vmatprep.subr.bf16.mxu0 0
        %752 = vmatpush1.bf16.msra.mxu0 %v724
        %753 = vmatprep.subr.bf16.mxu0 0
        %754 = vmatpush1.bf16.msra.mxu0 %v723
        %755 = vmatprep.subr.bf16.mxu0 0
        %756 = vmatpush2.bf16.msra.mxu0 0
        %757 = vmatprep.subr.bf16.mxu0 0
        %758 = vmatpush2.bf16.msra.mxu0 0
        %759 = vmatprep.subr.bf16.mxu0 0
        %760 = vmatpush2.bf16.msra.mxu0 0
        %761 = vmatprep.subr.bf16.mxu0 0
        %762 = vmatpush2.bf16.msra.mxu0 0
        %763 = vmatprep.subr.bf16.mxu0 0
        %764 = vmatpush2.bf16.msra.mxu0 0
        %765 = vmatprep.subr.bf16.mxu0 0
        %766 = vmatpush2.bf16.msra.mxu0 0
        %767 = vmatprep.subr.bf16.mxu0 0
        %768 = vmatpush2.bf16.msra.mxu0 0
        %769 = vmatprep.subr.bf16.mxu0 0
        %770 = vmatpush2.bf16.msra.mxu0 0
        %771 = vmatprep.mubr.bf16.mxu0 0
        %772 = vmatmul.mubr.bf16.gmra.mxu0 %v667
        %v773 = vpop.f32.mrf.mxu0
        %v774 = vadd.f32 0.0, %v773
        %v775 = vpop.f32.mrf.mxu0
        %v776 = vpop.f32.mrf.mxu0
        %v777 = vadd.f32 0.0, %v776
        %v778 = vpop.f32.mrf.mxu0
        %779 = vmatprep.mubr.bf16.mxu0 0
        %780 = vmatmul.mubr.bf16.gmra.mxu0 %v668
        %v781 = vpop.f32.mrf.mxu0
        %v782 = vadd.f32 0.0, %v781
        %v783 = vpop.f32.mrf.mxu0
        %v784 = vpop.f32.mrf.mxu0
        %v785 = vadd.f32 0.0, %v784
        %v786 = vpop.f32.mrf.mxu0
        %787 = vmatprep.mubr.bf16.mxu0 0
        %788 = vmatmul.mubr.bf16.gmra.mxu0 %v669
        %v789 = vpop.f32.mrf.mxu0
        %v790 = vadd.f32 0.0, %v789
        %v791 = vpop.f32.mrf.mxu0
        %v792 = vpop.f32.mrf.mxu0
        %v793 = vadd.f32 0.0, %v792
        %v794 = vpop.f32.mrf.mxu0
        %795 = vmatprep.mubr.bf16.mxu0 0
        %796 = vmatmul.mubr.bf16.gmra.mxu0 %v670
        %v797 = vpop.f32.mrf.mxu0
        %v798 = vadd.f32 0.0, %v797
        %v799 = vpop.f32.mrf.mxu0
        %v800 = vpop.f32.mrf.mxu0
        %v801 = vadd.f32 0.0, %v800
        %v802 = vpop.f32.mrf.mxu0
        %803 = vmatprep.mubr.bf16.mxu0 0
        %804 = vmatmul.mubr.bf16.gmra.mxu0 %v671
        %v805 = vpop.f32.mrf.mxu0
        %v806 = vadd.f32 0.0, %v805
        %v807 = vpop.f32.mrf.mxu0
        %v808 = vpop.f32.mrf.mxu0
        %v809 = vadd.f32 0.0, %v808
        %v810 = vpop.f32.mrf.mxu0
        %811 = vmatprep.mubr.bf16.mxu0 0
        %812 = vmatmul.mubr.bf16.gmra.mxu0 %v672
        %v813 = vpop.f32.mrf.mxu0
        %v814 = vadd.f32 0.0, %v813
        %v815 = vpop.f32.mrf.mxu0
        %v816 = vpop.f32.mrf.mxu0
        %v817 = vadd.f32 0.0, %v816
        %v818 = vpop.f32.mrf.mxu0
        %819 = vmatprep.mubr.bf16.mxu0 0
        %820 = vmatmul.mubr.bf16.gmra.mxu0 %v673
        %v821 = vpop.f32.mrf.mxu0
        %v822 = vadd.f32 0.0, %v821
        %v823 = vpop.f32.mrf.mxu0
        %v824 = vpop.f32.mrf.mxu0
        %v825 = vadd.f32 0.0, %v824
        %v826 = vpop.f32.mrf.mxu0
        %827 = vmatprep.mubr.bf16.mxu0 0
        %828 = vmatmul.mubr.bf16.gmra.mxu0 %v674
        %v829 = vpop.f32.mrf.mxu0
        %v830 = vadd.f32 0.0, %v829
        %v831 = vpop.f32.mrf.mxu0
        %v832 = vpop.f32.mrf.mxu0
        %v833 = vadd.f32 0.0, %v832
        %v834 = vpop.f32.mrf.mxu0
        %835 = vdwg.mxu0
        %836 = vxpose.xlu0.b32.start [1/16] %v774, 128
        %837 = vxpose.xlu0.b32.cont [2/16] %v777, 128
        %838 = vxpose.xlu0.b32.cont [3/16] 0.0, 128
        %839 = vxpose.xlu0.b32.cont [4/16] 0.0, 128
        %840 = vxpose.xlu0.b32.cont [5/16] 0.0, 128
        %841 = vxpose.xlu0.b32.cont [6/16] 0.0, 128
        %842 = vxpose.xlu0.b32.cont [7/16] 0.0, 128
        %843 = vxpose.xlu0.b32.cont [8/16] 0.0, 128
        %844 = vxpose.xlu0.b32.cont [9/16] 0.0, 128
        %845 = vxpose.xlu0.b32.cont [10/16] 0.0, 128
        %846 = vxpose.xlu0.b32.cont [11/16] 0.0, 128
        %847 = vxpose.xlu0.b32.cont [12/16] 0.0, 128
        %848 = vxpose.xlu0.b32.cont [13/16] 0.0, 128
        %849 = vxpose.xlu0.b32.cont [14/16] 0.0, 128
        %850 = vxpose.xlu0.b32.cont [15/16] 0.0, 128
        %851 = vxpose.xlu0.b32.end [16/16] 0.0, 128
        %v852 = vpop.trf.xlu0
        %v853 = vpop.trf.xlu0
        %v854 = vpop.trf.xlu0
        %v855 = vpop.trf.xlu0
        %v856 = vpop.trf.xlu0
        %v857 = vpop.trf.xlu0
        %v858 = vpop.trf.xlu0
        %v859 = vpop.trf.xlu0
        %v860 = vpop.trf.xlu0
        %v861 = vpop.trf.xlu0
        %v862 = vpop.trf.xlu0
        %v863 = vpop.trf.xlu0
        %v864 = vpop.trf.xlu0
        %v865 = vpop.trf.xlu0
        %v866 = vpop.trf.xlu0
        %v867 = vpop.trf.xlu0
        %868 = vxpose.xlu0.b32.start [1/16] %v782, 128
        %869 = vxpose.xlu0.b32.cont [2/16] %v785, 128
        %870 = vxpose.xlu0.b32.cont [3/16] 0.0, 128
        %871 = vxpose.xlu0.b32.cont [4/16] 0.0, 128
        %872 = vxpose.xlu0.b32.cont [5/16] 0.0, 128
        %873 = vxpose.xlu0.b32.cont [6/16] 0.0, 128
        %874 = vxpose.xlu0.b32.cont [7/16] 0.0, 128
        %875 = vxpose.xlu0.b32.cont [8/16] 0.0, 128
        %876 = vxpose.xlu0.b32.cont [9/16] 0.0, 128
        %877 = vxpose.xlu0.b32.cont [10/16] 0.0, 128
        %878 = vxpose.xlu0.b32.cont [11/16] 0.0, 128
        %879 = vxpose.xlu0.b32.cont [12/16] 0.0, 128
        %880 = vxpose.xlu0.b32.cont [13/16] 0.0, 128
        %881 = vxpose.xlu0.b32.cont [14/16] 0.0, 128
        %882 = vxpose.xlu0.b32.cont [15/16] 0.0, 128
        %883 = vxpose.xlu0.b32.end [16/16] 0.0, 128
        %v884 = vpop.trf.xlu0
        %v885 = vpop.trf.xlu0
        %v886 = vpop.trf.xlu0
        %v887 = vpop.trf.xlu0
        %v888 = vpop.trf.xlu0
        %v889 = vpop.trf.xlu0
        %v890 = vpop.trf.xlu0
        %v891 = vpop.trf.xlu0
        %v892 = vpop.trf.xlu0
        %v893 = vpop.trf.xlu0
        %v894 = vpop.trf.xlu0
        %v895 = vpop.trf.xlu0
        %v896 = vpop.trf.xlu0
        %v897 = vpop.trf.xlu0
        %v898 = vpop.trf.xlu0
        %v899 = vpop.trf.xlu0
        %900 = vxpose.xlu0.b32.start [1/16] %v790, 128
        %901 = vxpose.xlu0.b32.cont [2/16] %v793, 128
        %902 = vxpose.xlu0.b32.cont [3/16] 0.0, 128
        %903 = vxpose.xlu0.b32.cont [4/16] 0.0, 128
        %904 = vxpose.xlu0.b32.cont [5/16] 0.0, 128
        %905 = vxpose.xlu0.b32.cont [6/16] 0.0, 128
        %906 = vxpose.xlu0.b32.cont [7/16] 0.0, 128
        %907 = vxpose.xlu0.b32.cont [8/16] 0.0, 128
        %908 = vxpose.xlu0.b32.cont [9/16] 0.0, 128
        %909 = vxpose.xlu0.b32.cont [10/16] 0.0, 128
        %910 = vxpose.xlu0.b32.cont [11/16] 0.0, 128
        %911 = vxpose.xlu0.b32.cont [12/16] 0.0, 128
        %912 = vxpose.xlu0.b32.cont [13/16] 0.0, 128
        %913 = vxpose.xlu0.b32.cont [14/16] 0.0, 128
        %914 = vxpose.xlu0.b32.cont [15/16] 0.0, 128
        %915 = vxpose.xlu0.b32.end [16/16] 0.0, 128
        %v916 = vpop.trf.xlu0
        %v917 = vpop.trf.xlu0
        %v918 = vpop.trf.xlu0
        %v919 = vpop.trf.xlu0
        %v920 = vpop.trf.xlu0
        %v921 = vpop.trf.xlu0
        %v922 = vpop.trf.xlu0
        %v923 = vpop.trf.xlu0
        %v924 = vpop.trf.xlu0
        %v925 = vpop.trf.xlu0
        %v926 = vpop.trf.xlu0
        %v927 = vpop.trf.xlu0
        %v928 = vpop.trf.xlu0
        %v929 = vpop.trf.xlu0
        %v930 = vpop.trf.xlu0
        %v931 = vpop.trf.xlu0
        %932 = vxpose.xlu0.b32.start [1/16] %v798, 128
        %933 = vxpose.xlu0.b32.cont [2/16] %v801, 128
        %934 = vxpose.xlu0.b32.cont [3/16] 0.0, 128
        %935 = vxpose.xlu0.b32.cont [4/16] 0.0, 128
        %936 = vxpose.xlu0.b32.cont [5/16] 0.0, 128
        %937 = vxpose.xlu0.b32.cont [6/16] 0.0, 128
        %938 = vxpose.xlu0.b32.cont [7/16] 0.0, 128
        %939 = vxpose.xlu0.b32.cont [8/16] 0.0, 128
        %940 = vxpose.xlu0.b32.cont [9/16] 0.0, 128
        %941 = vxpose.xlu0.b32.cont [10/16] 0.0, 128
        %942 = vxpose.xlu0.b32.cont [11/16] 0.0, 128
        %943 = vxpose.xlu0.b32.cont [12/16] 0.0, 128
        %944 = vxpose.xlu0.b32.cont [13/16] 0.0, 128
        %945 = vxpose.xlu0.b32.cont [14/16] 0.0, 128
        %946 = vxpose.xlu0.b32.cont [15/16] 0.0, 128
        %947 = vxpose.xlu0.b32.end [16/16] 0.0, 128
        %v948 = vpop.trf.xlu0
        %v949 = vpop.trf.xlu0
        %v950 = vpop.trf.xlu0
        %v951 = vpop.trf.xlu0
        %v952 = vpop.trf.xlu0
        %v953 = vpop.trf.xlu0
        %v954 = vpop.trf.xlu0
        %v955 = vpop.trf.xlu0
        %v956 = vpop.trf.xlu0
        %v957 = vpop.trf.xlu0
        %v958 = vpop.trf.xlu0
        %v959 = vpop.trf.xlu0
        %v960 = vpop.trf.xlu0
        %v961 = vpop.trf.xlu0
        %v962 = vpop.trf.xlu0
        %v963 = vpop.trf.xlu0
        %964 = vxpose.xlu0.b32.start [1/16] %v806, 128
        %965 = vxpose.xlu0.b32.cont [2/16] %v809, 128
        %966 = vxpose.xlu0.b32.cont [3/16] 0.0, 128
        %967 = vxpose.xlu0.b32.cont [4/16] 0.0, 128
        %968 = vxpose.xlu0.b32.cont [5/16] 0.0, 128
        %969 = vxpose.xlu0.b32.cont [6/16] 0.0, 128
        %970 = vxpose.xlu0.b32.cont [7/16] 0.0, 128
        %971 = vxpose.xlu0.b32.cont [8/16] 0.0, 128
        %972 = vxpose.xlu0.b32.cont [9/16] 0.0, 128
        %973 = vxpose.xlu0.b32.cont [10/16] 0.0, 128
        %974 = vxpose.xlu0.b32.cont [11/16] 0.0, 128
        %975 = vxpose.xlu0.b32.cont [12/16] 0.0, 128
        %976 = vxpose.xlu0.b32.cont [13/16] 0.0, 128
        %977 = vxpose.xlu0.b32.cont [14/16] 0.0, 128
        %978 = vxpose.xlu0.b32.cont [15/16] 0.0, 128
        %979 = vxpose.xlu0.b32.end [16/16] 0.0, 128
        %v980 = vpop.trf.xlu0
        %v981 = vpop.trf.xlu0
        %v982 = vpop.trf.xlu0
        %v983 = vpop.trf.xlu0
        %v984 = vpop.trf.xlu0
        %v985 = vpop.trf.xlu0
        %v986 = vpop.trf.xlu0
        %v987 = vpop.trf.xlu0
        %v988 = vpop.trf.xlu0
        %v989 = vpop.trf.xlu0
        %v990 = vpop.trf.xlu0
        %v991 = vpop.trf.xlu0
        %v992 = vpop.trf.xlu0
        %v993 = vpop.trf.xlu0
        %v994 = vpop.trf.xlu0
        %v995 = vpop.trf.xlu0
        %996 = vxpose.xlu0.b32.start [1/16] %v814, 128
        %997 = vxpose.xlu0.b32.cont [2/16] %v817, 128
        %998 = vxpose.xlu0.b32.cont [3/16] 0.0, 128
        %999 = vxpose.xlu0.b32.cont [4/16] 0.0, 128
        %1000 = vxpose.xlu0.b32.cont [5/16] 0.0, 128
        %1001 = vxpose.xlu0.b32.cont [6/16] 0.0, 128
        %1002 = vxpose.xlu0.b32.cont [7/16] 0.0, 128
        %1003 = vxpose.xlu0.b32.cont [8/16] 0.0, 128
        %1004 = vxpose.xlu0.b32.cont [9/16] 0.0, 128
        %1005 = vxpose.xlu0.b32.cont [10/16] 0.0, 128
        %1006 = vxpose.xlu0.b32.cont [11/16] 0.0, 128
        %1007 = vxpose.xlu0.b32.cont [12/16] 0.0, 128
        %1008 = vxpose.xlu0.b32.cont [13/16] 0.0, 128
        %1009 = vxpose.xlu0.b32.cont [14/16] 0.0, 128
        %1010 = vxpose.xlu0.b32.cont [15/16] 0.0, 128
        %1011 = vxpose.xlu0.b32.end [16/16] 0.0, 128
        %v1012 = vpop.trf.xlu0
        %v1013 = vpop.trf.xlu0
        %v1014 = vpop.trf.xlu0
        %v1015 = vpop.trf.xlu0
        %v1016 = vpop.trf.xlu0
        %v1017 = vpop.trf.xlu0
        %v1018 = vpop.trf.xlu0
        %v1019 = vpop.trf.xlu0
        %v1020 = vpop.trf.xlu0
        %v1021 = vpop.trf.xlu0
        %v1022 = vpop.trf.xlu0
        %v1023 = vpop.trf.xlu0
        %v1024 = vpop.trf.xlu0
        %v1025 = vpop.trf.xlu0
        %v1026 = vpop.trf.xlu0
        %v1027 = vpop.trf.xlu0
        %1028 = vxpose.xlu0.b32.start [1/16] %v822, 128
        %1029 = vxpose.xlu0.b32.cont [2/16] %v825, 128
        %1030 = vxpose.xlu0.b32.cont [3/16] 0.0, 128
        %1031 = vxpose.xlu0.b32.cont [4/16] 0.0, 128
        %1032 = vxpose.xlu0.b32.cont [5/16] 0.0, 128
        %1033 = vxpose.xlu0.b32.cont [6/16] 0.0, 128
        %1034 = vxpose.xlu0.b32.cont [7/16] 0.0, 128
        %1035 = vxpose.xlu0.b32.cont [8/16] 0.0, 128
        %1036 = vxpose.xlu0.b32.cont [9/16] 0.0, 128
        %1037 = vxpose.xlu0.b32.cont [10/16] 0.0, 128
        %1038 = vxpose.xlu0.b32.cont [11/16] 0.0, 128
        %1039 = vxpose.xlu0.b32.cont [12/16] 0.0, 128
        %1040 = vxpose.xlu0.b32.cont [13/16] 0.0, 128
        %1041 = vxpose.xlu0.b32.cont [14/16] 0.0, 128
        %1042 = vxpose.xlu0.b32.cont [15/16] 0.0, 128
        %1043 = vxpose.xlu0.b32.end [16/16] 0.0, 128
        %v1044 = vpop.trf.xlu0
        %v1045 = vpop.trf.xlu0
        %v1046 = vpop.trf.xlu0
        %v1047 = vpop.trf.xlu0
        %v1048 = vpop.trf.xlu0
        %v1049 = vpop.trf.xlu0
        %v1050 = vpop.trf.xlu0
        %v1051 = vpop.trf.xlu0
        %v1052 = vpop.trf.xlu0
        %v1053 = vpop.trf.xlu0
        %v1054 = vpop.trf.xlu0
        %v1055 = vpop.trf.xlu0
        %v1056 = vpop.trf.xlu0
        %v1057 = vpop.trf.xlu0
        %v1058 = vpop.trf.xlu0
        %v1059 = vpop.trf.xlu0
        %1060 = vxpose.xlu0.b32.start [1/16] %v830, 128
        %1061 = vxpose.xlu0.b32.cont [2/16] %v833, 128
        %1062 = vxpose.xlu0.b32.cont [3/16] 0.0, 128
        %1063 = vxpose.xlu0.b32.cont [4/16] 0.0, 128
        %1064 = vxpose.xlu0.b32.cont [5/16] 0.0, 128
        %1065 = vxpose.xlu0.b32.cont [6/16] 0.0, 128
        %1066 = vxpose.xlu0.b32.cont [7/16] 0.0, 128
        %1067 = vxpose.xlu0.b32.cont [8/16] 0.0, 128
        %1068 = vxpose.xlu0.b32.cont [9/16] 0.0, 128
        %1069 = vxpose.xlu0.b32.cont [10/16] 0.0, 128
        %1070 = vxpose.xlu0.b32.cont [11/16] 0.0, 128
        %1071 = vxpose.xlu0.b32.cont [12/16] 0.0, 128
        %1072 = vxpose.xlu0.b32.cont [13/16] 0.0, 128
        %1073 = vxpose.xlu0.b32.cont [14/16] 0.0, 128
        %1074 = vxpose.xlu0.b32.cont [15/16] 0.0, 128
        %1075 = vxpose.xlu0.b32.end [16/16] 0.0, 128
        %v1076 = vpop.trf.xlu0
        %v1077 = vpop.trf.xlu0
        %v1078 = vpop.trf.xlu0
        %v1079 = vpop.trf.xlu0
        %v1080 = vpop.trf.xlu0
        %v1081 = vpop.trf.xlu0
        %v1082 = vpop.trf.xlu0
        %v1083 = vpop.trf.xlu0
        %v1084 = vpop.trf.xlu0
        %v1085 = vpop.trf.xlu0
        %v1086 = vpop.trf.xlu0
        %v1087 = vpop.trf.xlu0
        %v1088 = vpop.trf.xlu0
        %v1089 = vpop.trf.xlu0
        %v1090 = vpop.trf.xlu0
        %v1091 = vpop.trf.xlu0
        %vm1092 = vcmask 130048
        %v1093 = vsel %vm1092, %v852, -inf
        %v1094 = vsel %vm1092, %v884, -inf
        %v1095 = vsel %vm1092, %v916, -inf
        %v1096 = vsel %vm1092, %v948, -inf
        %v1097 = vsel %vm1092, %v980, -inf
        %v1098 = vmax.f32 %v1093, %v1097
        %v1099 = vsel %vm1092, %v1012, -inf
        %v1100 = vmax.f32 %v1094, %v1099
        %v1101 = vsel %vm1092, %v1044, -inf
        %v1102 = vmax.f32 %v1095, %v1101
        %v1103 = vsel %vm1092, %v1076, -inf
        %v1104 = vmax.f32 %v1096, %v1103
        %v1105 = vmax.f32 %v1098, %v1100
        %v1106 = vmax.f32 %v1102, %v1104
        %v1107 = vmax.f32 %v1105, %v1106
        %v1108 = vsub.f32 %v852, %v1107
        %v1109 = vsub.f32 %v884, %v1107
        %v1110 = vsub.f32 %v916, %v1107
        %v1111 = vsub.f32 %v948, %v1107
        %v1112 = vsub.f32 %v980, %v1107
        %v1113 = vsub.f32 %v1012, %v1107
        %v1114 = vsub.f32 %v1044, %v1107
        %v1115 = vsub.f32 %v1076, %v1107
        %v1116 = vmul.f32 %v1108, 1.442695
        %v1117 = vpow.pop %v1116
        %v1118 = vmul.f32 %v1109, 1.442695
        %v1119 = vpow.pop %v1118
        %v1120 = vmul.f32 %v1110, 1.442695
        %v1121 = vpow.pop %v1120
        %v1122 = vmul.f32 %v1111, 1.442695
        %v1123 = vpow.pop %v1122
        %v1124 = vmul.f32 %v1112, 1.442695
        %v1125 = vpow.pop %v1124
        %v1126 = vmul.f32 %v1113, 1.442695
        %v1127 = vpow.pop %v1126
        %v1128 = vmul.f32 %v1114, 1.442695
        %v1129 = vpow.pop %v1128
        %v1130 = vmul.f32 %v1115, 1.442695
        %v1131 = vpow.pop %v1130
        %v1132 = vsel %vm1092, %v1117, 0.0
        %v1133 = vsel %vm1092, %v1119, 0.0
        %v1134 = vadd.f32 %v1132, %v1133
        %v1135 = vsel %vm1092, %v1121, 0.0
        %v1136 = vadd.f32 %v1134, %v1135
        %v1137 = vsel %vm1092, %v1123, 0.0
        %v1138 = vadd.f32 %v1136, %v1137
        %v1139 = vsel %vm1092, %v1125, 0.0
        %v1140 = vadd.f32 %v1138, %v1139
        %v1141 = vsel %vm1092, %v1127, 0.0
        %v1142 = vadd.f32 %v1140, %v1141
        %v1143 = vsel %vm1092, %v1129, 0.0
        %v1144 = vadd.f32 %v1142, %v1143
        %v1145 = vsel %vm1092, %v1131, 0.0
        %v1146 = vadd.f32 %v1144, %v1145
        %v1147 = vrcp.pop %v1146
        %v1148 = vmul.f32 %v1117, %v1147
        %v1149 = vmul.f32 %v1119, %v1147
        %v1150 = vmul.f32 %v1121, %v1147
        %v1151 = vmul.f32 %v1123, %v1147
        %v1152 = vmul.f32 %v1125, %v1147
        %v1153 = vmul.f32 %v1127, %v1147
        %v1154 = vmul.f32 %v1129, %v1147
        %v1155 = vmul.f32 %v1131, %v1147
        %1156 = vst.msk [vmem:[%s302] sm:$0xff] %vm1092, %v1148
        %1157 = vst.msk [vmem:[%s302 + $0x8] sm:$0xff] %vm1092, %v1149
        %1158 = vst.msk [vmem:[%s302 + $0x10] sm:$0xff] %vm1092, %v1150
        %1159 = vst.msk [vmem:[%s302 + $0x18] sm:$0xff] %vm1092, %v1151
        %1160 = vst.msk [vmem:[%s302 + $0x20] sm:$0xff] %vm1092, %v1152
        %1161 = vst.msk [vmem:[%s302 + $0x28] sm:$0xff] %vm1092, %v1153
        %1162 = vst.msk [vmem:[%s302 + $0x30] sm:$0xff] %vm1092, %v1154
        %1163 = vst.msk [vmem:[%s302 + $0x38] sm:$0xff] %vm1092, %v1155
        %s1164 = sand.u32 %s179, 1
        %s1165 = scalar_lea.sflag [#allocation4], %s1164
        %s1166 = sand.u32 %s179, 1
        %s1167 = smul.addr %s1166, 64
        %s1168 = scalar_lea.vmem [#allocation7], %s1167
        // Predicated region
        $region53: #{tpu_custom_call.1} parent=43 // pred_check
          %p1169 = pneg %p189
        $region54: #{tpu_custom_call.1} parent=43 // pred_check_branch
          %1171 = sbr.rel (%p1169) target = $region56
        $region55: #{tpu_custom_call.1} parent=43 // pred_region
          %s1173 = ssub.s32 1024, 1024
          %1174 = vsyncadd %s1165, %s1173
          %s1175 = smul.addr %s28, 8
          %s1176 = sadd.s32 %s29, %s1175
          %s1177 = smul.addr %s1176, 128
          %s1178 = scalar_lea.hbm %s6, %s1177
          %s1179 = sshll.u32 %s1168, 4
          %s1180 = int_to_ptr.vmem [resolvable:$true] %s1179
          %1185 = dma.vmem_to_hbm [thread:$0]  %s1180, 1024, %s1178, %s1165, 128, 128, 8
        $region56: #{tpu_custom_call.1} parent=43 // pred_fallthru
          _
      $region44: #{tpu_custom_call.1} parent=5 // pred_fallthru
        _
      %p1186 = scmp.le.s32.totalorder 2, %s19
      // Predicated region
      $region57: #{tpu_custom_call.1} parent=5 // pred_check
        %p1187 = pneg %p1186
      $region58: #{tpu_custom_call.1} parent=5 // pred_check_branch
        %1189 = sbr.rel (%p1187) target = $region60
      $region59: #{tpu_custom_call.1} parent=5 // pred_region
        %s1190 = ssub.s32 %s19, 2
        // Predicated region
        $region61: #{tpu_custom_call.1} parent=59 // pred_check
          %p1191 = pneg %p195
        $region62: #{tpu_custom_call.1} parent=59 // pred_check_branch
          %1193 = sbr.rel (%p1191) target = $region64
        $region63: #{tpu_custom_call.1} parent=59 // pred_region
          %s1194 = sand.u32 %s180, 1
          %s1195 = scalar_lea.sflag [#allocation4], %s1194
          %s1196 = sand.u32 %s180, 1
          %s1197 = smul.addr %s1196, 64
          %s1198 = scalar_lea.vmem [#allocation7], %s1197
          %1199 = dma.done %s1195, 1024
        $region64: #{tpu_custom_call.1} parent=59 // pred_fallthru
          _
      $region60: #{tpu_custom_call.1} parent=5 // pred_fallthru
        _
    $region6: #{tpu_custom_call.1} parent=1 // loop_footer
      %s23 = sadd.s32 1, %s19
    $region7: #{tpu_custom_call.1} parent=1 // loop_footer_branch
      %18 = sbr.rel target = $region3
    $region8: #{tpu_custom_call.1} parent=1 // loop_exit
      _
    %1200 = vsyncpa [#allocation3], 1
    %s1201 = scalar_lea.sflag [#allocation3], 1
    %1202 = vsyncpa %s1201, 1
    %1203 = vsyncpa [#allocation6], 1
    %1204 = vsyncpa [#allocation4], 1
    %s1205 = scalar_lea.sflag [#allocation4], 1
    %1206 = vsyncpa %s1205, 1

</llo_original>
